<compile_context>
chip_gen: v7x
topology: tpu7x:2x2x1
jax: 0.10.0
libtpu: 0.0.40
codegen_flags: <defaults>
</compile_context>

<pallas_src>
import jax
import jax.numpy as jnp
from jax.experimental import pallas as pl
from jax.experimental.pallas import tpu as pltpu


def _round_up(x, m):
    return ((x + m - 1) // m) * m


def _reward_net_kernel(idx_ref, latent_ref, w_emb_ref, w1l_ref, w1e_ref,
                       b1_ref, w2t_ref, b2_ref, out_ref):
    # idx_ref   : (TN, 1) int32  action indices (vector data for select masks)
    # latent_ref: (TN, L) f32    latent-state tile
    # w_emb_ref : (A, E)  f32    embedding table (resident)
    # w1l_ref   : (L, H)  f32    W1[:L]   (latent half of first Linear)
    # w1e_ref   : (E, H)  f32    W1[L:]   (embedding half of first Linear)
    # b1_ref    : (1, H)  f32
    # w2t_ref   : (1, H)  f32    second Linear weight, transposed
    # b2_ref    : (1, 1)  f32
    # out_ref   : (TN, 1) f32
    idx = idx_ref[...]                                   # (TN, 1)
    latent = latent_ref[...]                             # (TN, L)
    tn = latent.shape[0]
    a_size, e_size = w_emb_ref.shape

    # Embedding gather: VPU select-accumulate over the small, static action set.
    # Out-of-range / padded indices fall through to zeros (same value as the
    # zeroed padding_idx row; PyTorch would raise on a truly invalid index).
    emb = jnp.zeros((tn, e_size), dtype=jnp.float32)
    for a in range(a_size):                              # unrolled; A is tiny
        emb = jnp.where(idx == a, w_emb_ref[a:a + 1, :], emb)

    # First Linear + ReLU:
    #   concat([latent, emb]) @ W1 == latent @ W1[:L] + emb @ W1[L:]
    h = (jnp.dot(latent, w1l_ref[...], preferred_element_type=jnp.float32)
         + jnp.dot(emb, w1e_ref[...], preferred_element_type=jnp.float32)
         + b1_ref[...])
    h = jnp.maximum(h, 0.0)                              # (TN, H)

    # Second Linear (H -> 1): VPU multiply + lane reduce.
    y = jnp.sum(h * w2t_ref[...], axis=-1, keepdims=True) + b2_ref[...]
    out_ref[...] = y.astype(out_ref.dtype)


def reward_network_forward(latent_state, action, params, *, token_tile=512):
    """latent_state: f32 (..., L); action: int (...,) with values in [0, A).
    params = (w_emb (A,E), w1 (L+E,H), b1 (H,), w2 (H,1), b2 (1,)).
    Returns f32 (..., 1) -- matches RewardNetwork.forward."""
    w_emb, w1, b1, w2, b2 = params
    a_size, e_size = w_emb.shape
    l_size = latent_state.shape[-1]
    h_size = w1.shape[1]
    assert w1.shape[0] == l_size + e_size

    lead = action.shape
    lat_flat = latent_state.reshape(-1, l_size).astype(jnp.float32)
    idx_flat = action.reshape(-1, 1).astype(jnp.int32)
    n = idx_flat.shape[0]

    # Token tile: as large as requested (amortizes per-step grid overhead) but
    # shrunk so the grid keeps >= 2 steps when possible (megacore sharding).
    tn = _round_up(min(token_tile, _round_up(n, 8)), 8)
    if n > 8 and _round_up(n, tn) // tn < 2:
        tn = max(8, _round_up((n + 1) // 2, 8))
    n_pad = _round_up(n, tn)
    if n_pad != n:
        # Padded tokens (idx=0, latent=0) are computed but sliced off below.
        lat_flat = jnp.pad(lat_flat, ((0, n_pad - n), (0, 0)))
        idx_flat = jnp.pad(idx_flat, ((0, n_pad - n), (0, 0)))

    out = pl.pallas_call(
        _reward_net_kernel,
        out_shape=jax.ShapeDtypeStruct((n_pad, 1), jnp.float32),
        grid_spec=pltpu.PrefetchScalarGridSpec(
            num_scalar_prefetch=0,
            grid=(n_pad // tn,),
            in_specs=[
                pl.BlockSpec((tn, 1), lambda i: (i, 0)),            # indices
                pl.BlockSpec((tn, l_size), lambda i: (i, 0)),       # latent
                pl.BlockSpec((a_size, e_size), lambda i: (0, 0)),   # emb table
                pl.BlockSpec((l_size, h_size), lambda i: (0, 0)),   # W1[:L]
                pl.BlockSpec((e_size, h_size), lambda i: (0, 0)),   # W1[L:]
                pl.BlockSpec((1, h_size), lambda i: (0, 0)),        # b1
                pl.BlockSpec((1, h_size), lambda i: (0, 0)),        # W2^T
                pl.BlockSpec((1, 1), lambda i: (0, 0)),             # b2
            ],
            out_specs=pl.BlockSpec((tn, 1), lambda i: (i, 0)),
        ),
        compiler_params=pltpu.CompilerParams(
            dimension_semantics=("parallel",)),
    )(idx_flat, lat_flat,
      w_emb.astype(jnp.float32),
      w1[:l_size].astype(jnp.float32),
      w1[l_size:].astype(jnp.float32),
      b1.reshape(1, h_size).astype(jnp.float32),
      w2.reshape(1, h_size).astype(jnp.float32),
      b2.reshape(1, 1).astype(jnp.float32))

    return out[:n].reshape(*lead, 1)


def init_reward_network_params(key, action_space_size, embedding_size,
                               latent_size, hidden_size, padding_idx=-1):
    """nn.Embedding-style N(0,1) with the padding row zeroed, plus
    nn.Linear-style uniform(+-1/sqrt(fan_in)) for both Linear layers."""
    k_e, k_w1, k_b1, k_w2, k_b2 = jax.random.split(key, 5)
    w_emb = jax.random.normal(k_e, (action_space_size, embedding_size),
                              dtype=jnp.float32)
    w_emb = w_emb.at[padding_idx % action_space_size].set(0.0)
    in1 = latent_size + embedding_size
    lim1 = 1.0 / (in1 ** 0.5)
    w1 = jax.random.uniform(k_w1, (in1, hidden_size), jnp.float32, -lim1, lim1)
    b1 = jax.random.uniform(k_b1, (hidden_size,), jnp.float32, -lim1, lim1)
    lim2 = 1.0 / (hidden_size ** 0.5)
    w2 = jax.random.uniform(k_w2, (hidden_size, 1), jnp.float32, -lim2, lim2)
    b2 = jax.random.uniform(k_b2, (1,), jnp.float32, -lim2, lim2)
    return (w_emb, w1, b1, w2, b2)


if __name__ == "__main__":
    ACTION_SPACE = 6     # action_space_size
    EMBED = 32           # embedding_size
    LATENT = 32          # latent_size
    HIDDEN = 64          # hidden_size
    B, S = 2, 8          # batch of (latent, action) pairs -> 16 tokens, grid=2

    key = jax.random.PRNGKey(0)
    k_params, k_lat, k_act = jax.random.split(key, 3)
    params = init_reward_network_params(k_params, ACTION_SPACE, EMBED,
                                        LATENT, HIDDEN, padding_idx=-1)
    latent = jax.random.normal(k_lat, (B, S, LATENT), dtype=jnp.float32)
    action = jax.random.randint(k_act, (B, S), 0, ACTION_SPACE, dtype=jnp.int32)

    out = reward_network_forward(latent, action, params)
    out = jax.block_until_ready(out)

    # Reference: plain JAX replica of RewardNetwork.forward.
    w_emb, w1, b1, w2, b2 = params
    emb = w_emb[action]
    x = jnp.concatenate([latent, emb], axis=-1)
    h = jnp.maximum(x @ w1 + b1, 0.0)
    ref = h @ w2 + b2

    assert out.shape == (B, S, 1), out.shape
    assert jnp.allclose(out, ref, atol=1e-4, rtol=1e-4), \
        float(jnp.max(jnp.abs(out - ref)))
    print("KERNEL_OK")
</pallas_src>

<mosaic_0001>
module attributes {stable_mosaic.version = 11 : i64} {
  func.func @_reward_net_kernel(%arg0: i32, %arg1: memref<8x1xi32, #tpu.memory_space<vmem>>, %arg2: memref<8x32xf32, #tpu.memory_space<vmem>>, %arg3: memref<6x32xf32, #tpu.memory_space<vmem>>, %arg4: memref<32x64xf32, #tpu.memory_space<vmem>>, %arg5: memref<32x64xf32, #tpu.memory_space<vmem>>, %arg6: memref<1x64xf32, #tpu.memory_space<vmem>>, %arg7: memref<1x64xf32, #tpu.memory_space<vmem>>, %arg8: memref<1x1xf32, #tpu.memory_space<vmem>>, %arg9: memref<8x1xf32, #tpu.memory_space<vmem>>) attributes {dimension_semantics = [#tpu.dimension_semantics<parallel>], iteration_bounds = array<i64: 2>, scalar_prefetch = 0 : i64, scratch_operands = 0 : i64, tpu.core_type = #tpu.core_type<tc>, window_params = [{transform_indices = @transform_0, window_bounds = array<i64: 8, 1>}, {transform_indices = @transform_1, window_bounds = array<i64: 8, 32>}, {pipeline_mode = #tpu.pipeline_mode<synchronous>, transform_indices = @transform_2, window_bounds = array<i64: 6, 32>}, {pipeline_mode = #tpu.pipeline_mode<synchronous>, transform_indices = @transform_3, window_bounds = array<i64: 32, 64>}, {pipeline_mode = #tpu.pipeline_mode<synchronous>, transform_indices = @transform_4, window_bounds = array<i64: 32, 64>}, {pipeline_mode = #tpu.pipeline_mode<synchronous>, transform_indices = @transform_5, window_bounds = array<i64: 1, 64>}, {pipeline_mode = #tpu.pipeline_mode<synchronous>, transform_indices = @transform_6, window_bounds = array<i64: 1, 64>}, {pipeline_mode = #tpu.pipeline_mode<synchronous>, transform_indices = @transform_7, window_bounds = array<i64: 1, 1>}, {transform_indices = @transform_8, window_bounds = array<i64: 8, 1>}]} {
    %c0 = arith.constant 0 : index
    %c0_0 = arith.constant 0 : index
    %0 = vector.load %arg1[%c0, %c0_0] : memref<8x1xi32, #tpu.memory_space<vmem>>, vector<8x1xi32>
    %c0_1 = arith.constant 0 : index
    %c0_2 = arith.constant 0 : index
    %1 = vector.load %arg2[%c0_1, %c0_2] : memref<8x32xf32, #tpu.memory_space<vmem>>, vector<8x32xf32>
    %cst = arith.constant 0.000000e+00 : f32
    %2 = vector.broadcast %cst : f32 to vector<8x32xf32>
    %c0_i32 = arith.constant 0 : i32
    %3 = vector.broadcast %c0_i32 : i32 to vector<8x1xi32>
    %4 = arith.cmpi eq, %0, %3 : vector<8x1xi32>
    %c0_3 = arith.constant 0 : index
    %c0_4 = arith.constant 0 : index
    %5 = vector.load %arg3[%c0_3, %c0_4] : memref<6x32xf32, #tpu.memory_space<vmem>>, vector<1x32xf32>
    %6 = vector.shape_cast %4 : vector<8x1xi1> to vector<8x1xi1>
    %7 = vector.broadcast %6 : vector<8x1xi1> to vector<8x32xi1>
    %8 = vector.shape_cast %5 : vector<1x32xf32> to vector<1x32xf32>
    %9 = vector.broadcast %8 : vector<1x32xf32> to vector<8x32xf32>
    %10 = arith.select %7, %9, %2 : vector<8x32xi1>, vector<8x32xf32>
    %c1_i32 = arith.constant 1 : i32
    %11 = vector.broadcast %c1_i32 : i32 to vector<8x1xi32>
    %12 = arith.cmpi eq, %0, %11 : vector<8x1xi32>
    %c1 = arith.constant 1 : index
    %c0_5 = arith.constant 0 : index
    %13 = vector.load %arg3[%c1, %c0_5] : memref<6x32xf32, #tpu.memory_space<vmem>>, vector<1x32xf32>
    %14 = vector.shape_cast %12 : vector<8x1xi1> to vector<8x1xi1>
    %15 = vector.broadcast %14 : vector<8x1xi1> to vector<8x32xi1>
    %16 = vector.shape_cast %13 : vector<1x32xf32> to vector<1x32xf32>
    %17 = vector.broadcast %16 : vector<1x32xf32> to vector<8x32xf32>
    %18 = arith.select %15, %17, %10 : vector<8x32xi1>, vector<8x32xf32>
    %c2_i32 = arith.constant 2 : i32
    %19 = vector.broadcast %c2_i32 : i32 to vector<8x1xi32>
    %20 = arith.cmpi eq, %0, %19 : vector<8x1xi32>
    %c2 = arith.constant 2 : index
    %c0_6 = arith.constant 0 : index
    %21 = vector.load %arg3[%c2, %c0_6] : memref<6x32xf32, #tpu.memory_space<vmem>>, vector<1x32xf32>
    %22 = vector.shape_cast %20 : vector<8x1xi1> to vector<8x1xi1>
    %23 = vector.broadcast %22 : vector<8x1xi1> to vector<8x32xi1>
    %24 = vector.shape_cast %21 : vector<1x32xf32> to vector<1x32xf32>
    %25 = vector.broadcast %24 : vector<1x32xf32> to vector<8x32xf32>
    %26 = arith.select %23, %25, %18 : vector<8x32xi1>, vector<8x32xf32>
    %c3_i32 = arith.constant 3 : i32
    %27 = vector.broadcast %c3_i32 : i32 to vector<8x1xi32>
    %28 = arith.cmpi eq, %0, %27 : vector<8x1xi32>
    %c3 = arith.constant 3 : index
    %c0_7 = arith.constant 0 : index
    %29 = vector.load %arg3[%c3, %c0_7] : memref<6x32xf32, #tpu.memory_space<vmem>>, vector<1x32xf32>
    %30 = vector.shape_cast %28 : vector<8x1xi1> to vector<8x1xi1>
    %31 = vector.broadcast %30 : vector<8x1xi1> to vector<8x32xi1>
    %32 = vector.shape_cast %29 : vector<1x32xf32> to vector<1x32xf32>
    %33 = vector.broadcast %32 : vector<1x32xf32> to vector<8x32xf32>
    %34 = arith.select %31, %33, %26 : vector<8x32xi1>, vector<8x32xf32>
    %c4_i32 = arith.constant 4 : i32
    %35 = vector.broadcast %c4_i32 : i32 to vector<8x1xi32>
    %36 = arith.cmpi eq, %0, %35 : vector<8x1xi32>
    %c4 = arith.constant 4 : index
    %c0_8 = arith.constant 0 : index
    %37 = vector.load %arg3[%c4, %c0_8] : memref<6x32xf32, #tpu.memory_space<vmem>>, vector<1x32xf32>
    %38 = vector.shape_cast %36 : vector<8x1xi1> to vector<8x1xi1>
    %39 = vector.broadcast %38 : vector<8x1xi1> to vector<8x32xi1>
    %40 = vector.shape_cast %37 : vector<1x32xf32> to vector<1x32xf32>
    %41 = vector.broadcast %40 : vector<1x32xf32> to vector<8x32xf32>
    %42 = arith.select %39, %41, %34 : vector<8x32xi1>, vector<8x32xf32>
    %c5_i32 = arith.constant 5 : i32
    %43 = vector.broadcast %c5_i32 : i32 to vector<8x1xi32>
    %44 = arith.cmpi eq, %0, %43 : vector<8x1xi32>
    %c5 = arith.constant 5 : index
    %c0_9 = arith.constant 0 : index
    %45 = vector.load %arg3[%c5, %c0_9] : memref<6x32xf32, #tpu.memory_space<vmem>>, vector<1x32xf32>
    %46 = vector.shape_cast %44 : vector<8x1xi1> to vector<8x1xi1>
    %47 = vector.broadcast %46 : vector<8x1xi1> to vector<8x32xi1>
    %48 = vector.shape_cast %45 : vector<1x32xf32> to vector<1x32xf32>
    %49 = vector.broadcast %48 : vector<1x32xf32> to vector<8x32xf32>
    %50 = arith.select %47, %49, %42 : vector<8x32xi1>, vector<8x32xf32>
    %c0_10 = arith.constant 0 : index
    %c0_11 = arith.constant 0 : index
    %51 = vector.load %arg4[%c0_10, %c0_11] : memref<32x64xf32, #tpu.memory_space<vmem>>, vector<32x64xf32>
    %cst_12 = arith.constant dense<0.000000e+00> : vector<8x64xf32>
    %52 = tpu.matmul %1, %51, %cst_12 {dimension_numbers = #tpu.dot_dimension_numbers<[1], [0], [0], [1], [0, 0, 1, 1], [], []>} : vector<8x32xf32>, vector<32x64xf32>, vector<8x64xf32> -> vector<8x64xf32>
    %c0_13 = arith.constant 0 : index
    %c0_14 = arith.constant 0 : index
    %53 = vector.load %arg5[%c0_13, %c0_14] : memref<32x64xf32, #tpu.memory_space<vmem>>, vector<32x64xf32>
    %cst_15 = arith.constant dense<0.000000e+00> : vector<8x64xf32>
    %54 = tpu.matmul %50, %53, %cst_15 {dimension_numbers = #tpu.dot_dimension_numbers<[1], [0], [0], [1], [0, 0, 1, 1], [], []>} : vector<8x32xf32>, vector<32x64xf32>, vector<8x64xf32> -> vector<8x64xf32>
    %55 = arith.addf %52, %54 : vector<8x64xf32>
    %c0_16 = arith.constant 0 : index
    %c0_17 = arith.constant 0 : index
    %56 = vector.load %arg6[%c0_16, %c0_17] : memref<1x64xf32, #tpu.memory_space<vmem>>, vector<1x64xf32>
    %57 = vector.broadcast %56 : vector<1x64xf32> to vector<8x64xf32>
    %58 = arith.addf %55, %57 : vector<8x64xf32>
    %cst_18 = arith.constant 0.000000e+00 : f32
    %59 = vector.broadcast %cst_18 : f32 to vector<8x64xf32>
    %60 = arith.maximumf %58, %59 : vector<8x64xf32>
    %c0_19 = arith.constant 0 : index
    %c0_20 = arith.constant 0 : index
    %61 = vector.load %arg7[%c0_19, %c0_20] : memref<1x64xf32, #tpu.memory_space<vmem>>, vector<1x64xf32>
    %62 = vector.broadcast %61 : vector<1x64xf32> to vector<8x64xf32>
    %63 = arith.mulf %60, %62 : vector<8x64xf32>
    %cst_21 = arith.constant dense<0.000000e+00> : vector<8xf32>
    %64 = vector.multi_reduction <add>, %63, %cst_21 [1] : vector<8x64xf32> to vector<8xf32>
    %65 = vector.shape_cast %64 : vector<8xf32> to vector<8x1xf32>
    %c0_22 = arith.constant 0 : index
    %c0_23 = arith.constant 0 : index
    %66 = vector.load %arg8[%c0_22, %c0_23] : memref<1x1xf32, #tpu.memory_space<vmem>>, vector<1x1xf32>
    %67 = vector.broadcast %66 : vector<1x1xf32> to vector<8x1xf32>
    %68 = arith.addf %65, %67 : vector<8x1xf32>
    %c0_24 = arith.constant 0 : index
    %c0_25 = arith.constant 0 : index
    %69 = vector.load %arg9[%c0_24, %c0_25] : memref<8x1xf32, #tpu.memory_space<vmem>>, vector<8x1xf32>
    tpu.vector_store %arg9[%c0_24, %c0_25], %68 {strides = array<i32>} : memref<8x1xf32, #tpu.memory_space<vmem>>, vector<8x1xf32>,
    return
  }
  func.func @transform_0(%arg0: i32) -> (i32, i32) {
    %c0_i32 = arith.constant 0 : i32
    %c0_i32_0 = arith.constant 0 : i32
    return %arg0, %c0_i32 : i32, i32
  }
  func.func @transform_1(%arg0: i32) -> (i32, i32) {
    %c0_i32 = arith.constant 0 : i32
    %c0_i32_0 = arith.constant 0 : i32
    return %arg0, %c0_i32 : i32, i32
  }
  func.func @transform_2(%arg0: i32) -> (i32, i32) {
    %c0_i32 = arith.constant 0 : i32
    %c0_i32_0 = arith.constant 0 : i32
    %c0_i32_1 = arith.constant 0 : i32
    return %c0_i32, %c0_i32_0 : i32, i32
  }
  func.func @transform_3(%arg0: i32) -> (i32, i32) {
    %c0_i32 = arith.constant 0 : i32
    %c0_i32_0 = arith.constant 0 : i32
    %c0_i32_1 = arith.constant 0 : i32
    return %c0_i32, %c0_i32_0 : i32, i32
  }
  func.func @transform_4(%arg0: i32) -> (i32, i32) {
    %c0_i32 = arith.constant 0 : i32
    %c0_i32_0 = arith.constant 0 : i32
    %c0_i32_1 = arith.constant 0 : i32
    return %c0_i32, %c0_i32_0 : i32, i32
  }
  func.func @transform_5(%arg0: i32) -> (i32, i32) {
    %c0_i32 = arith.constant 0 : i32
    %c0_i32_0 = arith.constant 0 : i32
    %c0_i32_1 = arith.constant 0 : i32
    return %c0_i32, %c0_i32_0 : i32, i32
  }
  func.func @transform_6(%arg0: i32) -> (i32, i32) {
    %c0_i32 = arith.constant 0 : i32
    %c0_i32_0 = arith.constant 0 : i32
    %c0_i32_1 = arith.constant 0 : i32
    return %c0_i32, %c0_i32_0 : i32, i32
  }
  func.func @transform_7(%arg0: i32) -> (i32, i32) {
    %c0_i32 = arith.constant 0 : i32
    %c0_i32_0 = arith.constant 0 : i32
    %c0_i32_1 = arith.constant 0 : i32
    return %c0_i32, %c0_i32_0 : i32, i32
  }
  func.func @transform_8(%arg0: i32) -> (i32, i32) {
    %c0_i32 = arith.constant 0 : i32
    %c0_i32_0 = arith.constant 0 : i32
    return %arg0, %c0_i32 : i32, i32
  }
}

</mosaic_0001>

<llo_original>
// kernel: tpu_custom_call.1
$region0: #{tpu_custom_call.1}
  #allocation0 [shape = 'u32[]', space=smem, size = 0x4, offset = 0x4, fixed_abs, tag = 'smem constant byte address 0x4 - core index']
  #allocation1 [shape = 'u32[144,128]{1,0:T(1,128)}', space=vmem, size = 0x12000, scoped, tag = 'internal scratch']
  #allocation2 [shape = 'f32[1,1]{1,0:T(1,128)S(1)}', space=vmem, size = 0x200, scoped, tag = 'scoped memory for tpu_custom_call.1']
  %s0 = inlined_call_operand.vmem [shape: s32[16,1], index: 0, kind: input, shape index: {}]
  %s1 = inlined_call_operand.hbm [shape: f32[16,32], index: 1, kind: input, shape index: {}]
  %s2 = inlined_call_operand.hbm [shape: f32[6,32], index: 2, kind: input, shape index: {}]
  %s3 = inlined_call_operand.vmem [shape: f32[32,64], index: 3, kind: input, shape index: {}]
  %s4 = inlined_call_operand.hbm [shape: f32[32,64], index: 4, kind: input, shape index: {}]
  %s5 = inlined_call_operand.vmem [shape: f32[1,64], index: 5, kind: input, shape index: {}]
  %s6 = inlined_call_operand.vmem [shape: f32[1,64], index: 6, kind: input, shape index: {}]
  %s7 = inlined_call_operand.<no memory space> [shape: f32[1,1], index: 7, kind: input, shape index: {}]
  %s8 = inlined_call_operand.vmem [shape: f32[16,1], index: 8, kind: output, shape index: {}]
  %s9 = sld [smem:[#allocation0]]
  $region77: #{tpu_custom_call.1} parent=0
    _
  %s11 = ssub.s32 1, %s9
  %s12 = scalar_select 0, %s11, %s9
  %v13 = vstv %s7
  %14 = vst [vmem:[#allocation2] sm:$0x1] %v13
  $region1: #{tpu_custom_call.1} parent=0
    #allocation3 [shape = 'u8[8192]{0}', space=vmem, size = 0x2000, scoped, tag = 'input window, operand 1']
    #allocation4 [shape = 's32[2]{0}', space=sflag, size = 0x8, scoped, tag = 'scoped memory for tpu_custom_call.1']
    #allocation5 [shape = 'u8[4096]{0}', space=vmem, size = 0x1000, scoped, tag = 'input window, operand 2, single buffered']
    #allocation6 [shape = 's32[1]{0}', space=sflag, size = 0x4, scoped, tag = 'scoped memory for tpu_custom_call.1']
    #allocation7 [shape = 'u8[16384]{0}', space=vmem, size = 0x4000, scoped, tag = 'input window, operand 4, single buffered']
    %15 = vsyncpa [#allocation4], 0
    %s16 = scalar_lea.sflag [#allocation4], 1
    %17 = vsyncpa %s16, 0
    %18 = vsyncpa [#allocation6], 0
    loop: start=0, step=1, limit=4
    $region2: #{tpu_custom_call.1} parent=1 // loop_pre_header
      _
    $region3: #{tpu_custom_call.1} parent=1 // loop_header
      %s20 = sphi 0, %s24
      %p21 = scmp.ge.s32.totalorder %s20, 4
      %s30 = sphi 0, %s32
      %s33 = sphi 0, %s30
      %s34 = sphi 0, %s33
      %s50 = sphi 0, %s34
      %s56 = sphi 0, %s58
      %s59 = sphi 0, %s56
      %s60 = sphi 0, %s59
      %s76 = sphi 0, %s60
      %s80 = sphi 0, %s80
      %s82 = sphi 0, %s80
      %s83 = sphi 0, %s82
      %s97 = sphi 0, %s83
      %s101 = sphi 0, %s101
      %s103 = sphi 0, %s101
      %s104 = sphi 0, %s103
      %s118 = sphi 0, %s104
      %s122 = sphi 0, %s122
      %s124 = sphi 0, %s122
      %s125 = sphi 0, %s124
      %s139 = sphi 0, %s125
      %s143 = sphi 0, %s143
      %s145 = sphi 0, %s143
      %s146 = sphi 0, %s145
      %s160 = sphi 0, %s146
      %s164 = sphi 0, %s164
      %s166 = sphi 0, %s164
      %s167 = sphi 0, %s166
      %s181 = sphi 0, %s167
      %s185 = sphi 0, %s185
      %s187 = sphi 0, %s185
      %s188 = sphi 0, %s187
      %s202 = sphi 0, %s188
      %s208 = sphi 0, %s210
      %s211 = sphi 0, %s208
      %s212 = sphi 0, %s211
      %s228 = sphi 0, %s212
    $region4: #{tpu_custom_call.1} parent=1 // loop_header_branch
      %23 = sbr.rel (%p21) target = $region8
    $region5: #{tpu_custom_call.1} parent=1 // loop_body
      %s25 = ssub.s32 %s20, 1
      %s26 = ssub.s32 %s20, 2
      %s27 = sadd.s32 %s20, 1
      %s28 = ssub.s32 %s20, %s27
      %p29 = scmp.eq.s32.totalorder %s28, 0
      %s31 = sadd.s32 %s30, 1
      %s32 = scalar_select %p29, %s30, %s31
      %p35 = pneg %p29
      %p36 = scmp.eq.s32.totalorder %s20, 1
      %p37 = por %p35, %p36
      %p38 = scmp.ne.s32.totalorder %s30, %s33
      %p39 = scmp.eq.s32.totalorder %s20, 0
      %p40 = por %p38, %p39
      %p41 = scmp.ne.s32.totalorder %s30, %s33
      %p42 = scmp.eq.s32.totalorder %s25, 1
      %p43 = por %p41, %p42
      %p44 = scmp.ne.s32.totalorder %s33, %s34
      %p45 = scmp.eq.s32.totalorder %s25, 0
      %p46 = por %p44, %p45
      %p47 = scmp.ne.s32.totalorder %s33, %s34
      %p48 = scmp.eq.s32.totalorder %s26, 1
      %p49 = por %p47, %p48
      %p51 = scmp.ne.s32.totalorder %s34, %s50
      %p52 = scmp.eq.s32.totalorder %s26, 0
      %p53 = por %p51, %p52
      %s54 = ssub.s32 %s20, %s27
      %p55 = scmp.eq.s32.totalorder %s54, 0
      %s57 = sadd.s32 %s56, 1
      %s58 = scalar_select %p55, %s56, %s57
      %p61 = pneg %p55
      %p62 = scmp.eq.s32.totalorder %s20, 1
      %p63 = por %p61, %p62
      %p64 = scmp.ne.s32.totalorder %s56, %s59
      %p65 = scmp.eq.s32.totalorder %s20, 0
      %p66 = por %p64, %p65
      %p67 = scmp.ne.s32.totalorder %s56, %s59
      %p68 = scmp.eq.s32.totalorder %s25, 1
      %p69 = por %p67, %p68
      %p70 = scmp.ne.s32.totalorder %s59, %s60
      %p71 = scmp.eq.s32.totalorder %s25, 0
      %p72 = por %p70, %p71
      %p73 = scmp.ne.s32.totalorder %s59, %s60
      %p74 = scmp.eq.s32.totalorder %s26, 1
      %p75 = por %p73, %p74
      %p77 = scmp.ne.s32.totalorder %s60, %s76
      %p78 = scmp.eq.s32.totalorder %s26, 0
      %p79 = por %p77, %p78
      %s81 = sadd.s32 %s80, 1
      %p84 = scmp.eq.s32.totalorder %s20, 1
      %p85 = scmp.ne.s32.totalorder %s80, %s82
      %p86 = scmp.eq.s32.totalorder %s20, 0
      %p87 = por %p85, %p86
      %p88 = scmp.ne.s32.totalorder %s80, %s82
      %p89 = scmp.eq.s32.totalorder %s25, 1
      %p90 = por %p88, %p89
      %p91 = scmp.ne.s32.totalorder %s82, %s83
      %p92 = scmp.eq.s32.totalorder %s25, 0
      %p93 = por %p91, %p92
      %p94 = scmp.ne.s32.totalorder %s82, %s83
      %p95 = scmp.eq.s32.totalorder %s26, 1
      %p96 = por %p94, %p95
      %p98 = scmp.ne.s32.totalorder %s83, %s97
      %p99 = scmp.eq.s32.totalorder %s26, 0
      %p100 = por %p98, %p99
      %s102 = sadd.s32 %s101, 1
      %p105 = scmp.eq.s32.totalorder %s20, 1
      %p106 = scmp.ne.s32.totalorder %s101, %s103
      %p107 = scmp.eq.s32.totalorder %s20, 0
      %p108 = por %p106, %p107
      %p109 = scmp.ne.s32.totalorder %s101, %s103
      %p110 = scmp.eq.s32.totalorder %s25, 1
      %p111 = por %p109, %p110
      %p112 = scmp.ne.s32.totalorder %s103, %s104
      %p113 = scmp.eq.s32.totalorder %s25, 0
      %p114 = por %p112, %p113
      %p115 = scmp.ne.s32.totalorder %s103, %s104
      %p116 = scmp.eq.s32.totalorder %s26, 1
      %p117 = por %p115, %p116
      %p119 = scmp.ne.s32.totalorder %s104, %s118
      %p120 = scmp.eq.s32.totalorder %s26, 0
      %p121 = por %p119, %p120
      %s123 = sadd.s32 %s122, 1
      %p126 = scmp.eq.s32.totalorder %s20, 1
      %p127 = scmp.ne.s32.totalorder %s122, %s124
      %p128 = scmp.eq.s32.totalorder %s20, 0
      %p129 = por %p127, %p128
      %p130 = scmp.ne.s32.totalorder %s122, %s124
      %p131 = scmp.eq.s32.totalorder %s25, 1
      %p132 = por %p130, %p131
      %p133 = scmp.ne.s32.totalorder %s124, %s125
      %p134 = scmp.eq.s32.totalorder %s25, 0
      %p135 = por %p133, %p134
      %p136 = scmp.ne.s32.totalorder %s124, %s125
      %p137 = scmp.eq.s32.totalorder %s26, 1
      %p138 = por %p136, %p137
      %p140 = scmp.ne.s32.totalorder %s125, %s139
      %p141 = scmp.eq.s32.totalorder %s26, 0
      %p142 = por %p140, %p141
      %s144 = sadd.s32 %s143, 1
      %p147 = scmp.eq.s32.totalorder %s20, 1
      %p148 = scmp.ne.s32.totalorder %s143, %s145
      %p149 = scmp.eq.s32.totalorder %s20, 0
      %p150 = por %p148, %p149
      %p151 = scmp.ne.s32.totalorder %s143, %s145
      %p152 = scmp.eq.s32.totalorder %s25, 1
      %p153 = por %p151, %p152
      %p154 = scmp.ne.s32.totalorder %s145, %s146
      %p155 = scmp.eq.s32.totalorder %s25, 0
      %p156 = por %p154, %p155
      %p157 = scmp.ne.s32.totalorder %s145, %s146
      %p158 = scmp.eq.s32.totalorder %s26, 1
      %p159 = por %p157, %p158
      %p161 = scmp.ne.s32.totalorder %s146, %s160
      %p162 = scmp.eq.s32.totalorder %s26, 0
      %p163 = por %p161, %p162
      %s165 = sadd.s32 %s164, 1
      %p168 = scmp.eq.s32.totalorder %s20, 1
      %p169 = scmp.ne.s32.totalorder %s164, %s166
      %p170 = scmp.eq.s32.totalorder %s20, 0
      %p171 = por %p169, %p170
      %p172 = scmp.ne.s32.totalorder %s164, %s166
      %p173 = scmp.eq.s32.totalorder %s25, 1
      %p174 = por %p172, %p173
      %p175 = scmp.ne.s32.totalorder %s166, %s167
      %p176 = scmp.eq.s32.totalorder %s25, 0
      %p177 = por %p175, %p176
      %p178 = scmp.ne.s32.totalorder %s166, %s167
      %p179 = scmp.eq.s32.totalorder %s26, 1
      %p180 = por %p178, %p179
      %p182 = scmp.ne.s32.totalorder %s167, %s181
      %p183 = scmp.eq.s32.totalorder %s26, 0
      %p184 = por %p182, %p183
      %s186 = sadd.s32 %s185, 1
      %p189 = scmp.eq.s32.totalorder %s20, 1
      %p190 = scmp.ne.s32.totalorder %s185, %s187
      %p191 = scmp.eq.s32.totalorder %s20, 0
      %p192 = por %p190, %p191
      %p193 = scmp.ne.s32.totalorder %s185, %s187
      %p194 = scmp.eq.s32.totalorder %s25, 1
      %p195 = por %p193, %p194
      %p196 = scmp.ne.s32.totalorder %s187, %s188
      %p197 = scmp.eq.s32.totalorder %s25, 0
      %p198 = por %p196, %p197
      %p199 = scmp.ne.s32.totalorder %s187, %s188
      %p200 = scmp.eq.s32.totalorder %s26, 1
      %p201 = por %p199, %p200
      %p203 = scmp.ne.s32.totalorder %s188, %s202
      %p204 = scmp.eq.s32.totalorder %s26, 0
      %p205 = por %p203, %p204
      %s206 = ssub.s32 %s20, %s27
      %p207 = scmp.eq.s32.totalorder %s206, 0
      %s209 = sadd.s32 %s208, 1
      %s210 = scalar_select %p207, %s208, %s209
      %p213 = pneg %p207
      %p214 = scmp.eq.s32.totalorder %s20, 1
      %p215 = por %p213, %p214
      %p216 = scmp.ne.s32.totalorder %s208, %s211
      %p217 = scmp.eq.s32.totalorder %s20, 0
      %p218 = por %p216, %p217
      %p219 = scmp.ne.s32.totalorder %s208, %s211
      %p220 = scmp.eq.s32.totalorder %s25, 1
      %p221 = por %p219, %p220
      %p222 = scmp.ne.s32.totalorder %s211, %s212
      %p223 = scmp.eq.s32.totalorder %s25, 0
      %p224 = por %p222, %p223
      %p225 = scmp.ne.s32.totalorder %s211, %s212
      %p226 = scmp.eq.s32.totalorder %s26, 1
      %p227 = por %p225, %p226
      %p229 = scmp.ne.s32.totalorder %s212, %s228
      %p230 = scmp.eq.s32.totalorder %s26, 0
      %p231 = por %p229, %p230
      %p232 = scmp.le.s32.totalorder 1, %s20
      %p233 = scmp.lt.s32.totalorder %s20, 3
      %p234 = pnand %p232, %p233
      %p235 = pneg %p234
      // Predicated region
      $region9: #{tpu_custom_call.1} parent=5 // pred_check
        _
      $region10: #{tpu_custom_call.1} parent=5 // pred_check_branch
        %237 = sbr.rel (%p234) target = $region12
      $region11: #{tpu_custom_call.1} parent=5 // pred_region
        %s238 = ssub.s32 %s20, 1
        // Predicated region
        $region13: #{tpu_custom_call.1} parent=11 // pred_check
          %p239 = pneg %p93
        $region14: #{tpu_custom_call.1} parent=11 // pred_check_branch
          %241 = sbr.rel (%p239) target = $region16
        $region15: #{tpu_custom_call.1} parent=11 // pred_region
          %s243 = ssub.s32 128, 128
          %244 = vsyncadd [#allocation6], %s243
          %s246 = sshll.u32 [#allocation5], 4
          %s247 = int_to_ptr.vmem [resolvable:$true] %s246
          %249 = dma.hbm_to_vmem [thread:$0]  %s2, 128, %s247, [#allocation6]
        $region16: #{tpu_custom_call.1} parent=11 // pred_fallthru
          _
        // Predicated region
        $region17: #{tpu_custom_call.1} parent=11 // pred_check
          %p250 = pneg %p114
        $region18: #{tpu_custom_call.1} parent=11 // pred_check_branch
          %252 = sbr.rel (%p250) target = $region20
        $region19: #{tpu_custom_call.1} parent=11 // pred_region
          _
        $region20: #{tpu_custom_call.1} parent=11 // pred_fallthru
          _
        // Predicated region
        $region21: #{tpu_custom_call.1} parent=11 // pred_check
          %p253 = pneg %p135
        $region22: #{tpu_custom_call.1} parent=11 // pred_check_branch
          %255 = sbr.rel (%p253) target = $region24
        $region23: #{tpu_custom_call.1} parent=11 // pred_region
          %s257 = ssub.s32 512, 512
          %258 = vsyncadd [#allocation6], %s257
          %s259 = sshll.u32 [#allocation7], 4
          %s260 = int_to_ptr.vmem [resolvable:$true] %s259
          %265 = dma.hbm_to_vmem [thread:$0]  %s4, 512, %s260, [#allocation6], 128, 128, 8
        $region24: #{tpu_custom_call.1} parent=11 // pred_fallthru
          _
        // Predicated region
        $region25: #{tpu_custom_call.1} parent=11 // pred_check
          %p266 = pneg %p156
        $region26: #{tpu_custom_call.1} parent=11 // pred_check_branch
          %268 = sbr.rel (%p266) target = $region28
        $region27: #{tpu_custom_call.1} parent=11 // pred_region
          _
        $region28: #{tpu_custom_call.1} parent=11 // pred_fallthru
          _
        // Predicated region
        $region29: #{tpu_custom_call.1} parent=11 // pred_check
          %p269 = pneg %p177
        $region30: #{tpu_custom_call.1} parent=11 // pred_check_branch
          %271 = sbr.rel (%p269) target = $region32
        $region31: #{tpu_custom_call.1} parent=11 // pred_region
          _
        $region32: #{tpu_custom_call.1} parent=11 // pred_fallthru
          _
        // Predicated region
        $region33: #{tpu_custom_call.1} parent=11 // pred_check
          %p272 = pneg %p198
        $region34: #{tpu_custom_call.1} parent=11 // pred_check_branch
          %274 = sbr.rel (%p272) target = $region36
        $region35: #{tpu_custom_call.1} parent=11 // pred_region
          _
        $region36: #{tpu_custom_call.1} parent=11 // pred_fallthru
          _
      $region12: #{tpu_custom_call.1} parent=5 // pred_fallthru
        _
      %p275 = scmp.lt.s32.totalorder %s20, 2
      // Predicated region
      $region37: #{tpu_custom_call.1} parent=5 // pred_check
        %p276 = pneg %p275
      $region38: #{tpu_custom_call.1} parent=5 // pred_check_branch
        %278 = sbr.rel (%p276) target = $region40
      $region39: #{tpu_custom_call.1} parent=5 // pred_region
        // Predicated region
        $region41: #{tpu_custom_call.1} parent=39 // pred_check
          %p279 = pneg %p40
        $region42: #{tpu_custom_call.1} parent=39 // pred_check_branch
          %281 = sbr.rel (%p279) target = $region44
        $region43: #{tpu_custom_call.1} parent=39 // pred_region
          %p282 = scmp.lt.s32.totalorder %s20, 1
          %s283 = scalar_select %p282, %s20, 1
          %s284 = smul.addr %s283, 8
          %s285 = scalar_lea.vmem %s0, %s284
        $region44: #{tpu_custom_call.1} parent=39 // pred_fallthru
          _
        // Predicated region
        $region45: #{tpu_custom_call.1} parent=39 // pred_check
          %p286 = pneg %p66
        $region46: #{tpu_custom_call.1} parent=39 // pred_check_branch
          %288 = sbr.rel (%p286) target = $region48
        $region47: #{tpu_custom_call.1} parent=39 // pred_region
          %s289 = sand.u32 %s56, 1
          %s290 = scalar_lea.sflag [#allocation4], %s289
          %s291 = sand.u32 %s56, 1
          %s292 = smul.addr %s291, 8
          %s293 = scalar_lea.vmem [#allocation3], %s292
          %s295 = ssub.s32 128, 128
          %296 = vsyncadd %s290, %s295
          %s297 = smul.addr %s20, 128
          %s298 = scalar_lea.hbm %s1, %s297
          %s300 = sshll.u32 %s293, 4
          %s301 = int_to_ptr.vmem [resolvable:$true] %s300
          %303 = dma.hbm_to_vmem [thread:$0]  %s298, 128, %s301, %s290
        $region48: #{tpu_custom_call.1} parent=39 // pred_fallthru
          _
      $region40: #{tpu_custom_call.1} parent=5 // pred_fallthru
        _
      %p304 = scmp.le.s32.totalorder 1, %s20
      %p305 = scmp.lt.s32.totalorder %s20, 3
      %p306 = pnand %p304, %p305
      %p307 = pneg %p306
      // Predicated region
      $region49: #{tpu_custom_call.1} parent=5 // pred_check
        _
      $region50: #{tpu_custom_call.1} parent=5 // pred_check_branch
        %309 = sbr.rel (%p306) target = $region52
      $region51: #{tpu_custom_call.1} parent=5 // pred_region
        %s310 = ssub.s32 %s20, 1
        %s311 = sand.u32 %s59, 1
        %s312 = scalar_lea.sflag [#allocation4], %s311
        %s313 = sand.u32 %s59, 1
        %s314 = smul.addr %s313, 8
        %s315 = scalar_lea.vmem [#allocation3], %s314
        // Predicated region
        $region53: #{tpu_custom_call.1} parent=51 // pred_check
          %p316 = pneg %p72
        $region54: #{tpu_custom_call.1} parent=51 // pred_check_branch
          %318 = sbr.rel (%p316) target = $region56
        $region55: #{tpu_custom_call.1} parent=51 // pred_region
          %319 = dma.done %s312, 128
        $region56: #{tpu_custom_call.1} parent=51 // pred_fallthru
          _
        // Predicated region
        $region57: #{tpu_custom_call.1} parent=51 // pred_check
          %p320 = pneg %p93
        $region58: #{tpu_custom_call.1} parent=51 // pred_check_branch
          %322 = sbr.rel (%p320) target = $region60
        $region59: #{tpu_custom_call.1} parent=51 // pred_region
          %323 = dma.done [#allocation6], 128
        $region60: #{tpu_custom_call.1} parent=51 // pred_fallthru
          _
        // Predicated region
        $region61: #{tpu_custom_call.1} parent=51 // pred_check
          %p324 = pneg %p135
        $region62: #{tpu_custom_call.1} parent=51 // pred_check_branch
          %326 = sbr.rel (%p324) target = $region64
        $region63: #{tpu_custom_call.1} parent=51 // pred_region
          %327 = dma.done [#allocation6], 512
        $region64: #{tpu_custom_call.1} parent=51 // pred_fallthru
          _
        %p328 = scmp.lt.s32.totalorder %s25, 1
        %s329 = scalar_select %p328, %s25, 1
        %s330 = smul.addr %s329, 8
        %s331 = scalar_lea.vmem %s0, %s330
        %p332 = pneg %p46
        %p333 = pneg %p43
        %s334 = sand.u32 %s59, 1
        %s335 = scalar_lea.sflag [#allocation4], %s334
        %s336 = sand.u32 %s59, 1
        %s337 = smul.addr %s336, 8
        %s338 = scalar_lea.vmem [#allocation3], %s337
        %p339 = pneg %p72
        %p340 = pneg %p69
        %p341 = pneg %p93
        %p342 = pneg %p90
        %p343 = pneg %p114
        %p344 = pneg %p111
        %p345 = pneg %p135
        %p346 = pneg %p132
        %p347 = pneg %p156
        %p348 = pneg %p153
        %p349 = pneg %p177
        %p350 = pneg %p174
        %p351 = pneg %p198
        %p352 = pneg %p195
        %p353 = pneg %p224
        %p354 = pneg %p221
        %p355 = scmp.lt.s32.totalorder %s25, 1
        %s356 = scalar_select %p355, %s25, 1
        %s357 = smul.addr %s356, 8
        %s358 = scalar_lea.vmem %s8, %s357
        %p359 = scmp.lt.s32.totalorder %s25, 1
        %s360 = scalar_select %p359, %s25, 1
        %s361 = smul.addr %s360, 8
        %s362 = scalar_lea.vmem %s0, %s361
        %p363 = scmp.lt.s32.totalorder %s25, 1
        %s364 = scalar_select %p363, %s25, 1
        %s365 = smul.addr %s364, 8
        %s366 = scalar_lea.vmem %s8, %s365
        %v367 = vld [vmem:[%s362] sm:$0xff]
        %v368 = vld [vmem:[%s315] sm:$0xff]
        %vm369 = vcmp.eq.s32.totalorder %v367, 0
        %v370 = vld [vmem:[#allocation5] sm:$0x1]
        %v371 = vsel %vm369, 1, 0
        %372 = vset.pattern.permute.xlu0 0
        %373 = vperm.xlu0 %372, %v371
        %v374 = vpop.permute.xlu0 %373
        %vm375 = vcmp.eq.s32.totalorder %v374, 1
        %v376 = vlaneseq
        %v377 = vshrl.u32 %v376, 7
        %v378 = vsub.s32 0, %v377
        %v379 = vrot.slane %v370, %v378
        %v380 = vsel %vm375, %v379, 0.0
        %vm381 = vcmp.eq.s32.totalorder %v367, 1
        %v382 = vld [vmem:[#allocation5 + $0x1] sm:$0x1]
        %v383 = vsel %vm381, 1, 0
        %384 = vset.pattern.permute.xlu0 0
        %385 = vperm.xlu0 %384, %v383
        %v386 = vpop.permute.xlu0 %385
        %vm387 = vcmp.eq.s32.totalorder %v386, 1
        %v388 = vlaneseq
        %v389 = vshrl.u32 %v388, 7
        %v390 = vsub.s32 0, %v389
        %v391 = vrot.slane %v382, %v390
        %v392 = vsel %vm387, %v391, %v380
        %vm393 = vcmp.eq.s32.totalorder %v367, 2
        %v394 = vld [vmem:[#allocation5 + $0x2] sm:$0x1]
        %v395 = vsel %vm393, 1, 0
        %396 = vset.pattern.permute.xlu0 0
        %397 = vperm.xlu0 %396, %v395
        %v398 = vpop.permute.xlu0 %397
        %vm399 = vcmp.eq.s32.totalorder %v398, 1
        %v400 = vlaneseq
        %v401 = vshrl.u32 %v400, 7
        %v402 = vsub.s32 0, %v401
        %v403 = vrot.slane %v394, %v402
        %v404 = vsel %vm399, %v403, %v392
        %vm405 = vcmp.eq.s32.totalorder %v367, 3
        %v406 = vld [vmem:[#allocation5 + $0x3] sm:$0x1]
        %v407 = vsel %vm405, 1, 0
        %408 = vset.pattern.permute.xlu0 0
        %409 = vperm.xlu0 %408, %v407
        %v410 = vpop.permute.xlu0 %409
        %vm411 = vcmp.eq.s32.totalorder %v410, 1
        %v412 = vlaneseq
        %v413 = vshrl.u32 %v412, 7
        %v414 = vsub.s32 0, %v413
        %v415 = vrot.slane %v406, %v414
        %v416 = vsel %vm411, %v415, %v404
        %vm417 = vcmp.eq.s32.totalorder %v367, 4
        %v418 = vld [vmem:[#allocation5 + $0x4] sm:$0x1]
        %v419 = vsel %vm417, 1, 0
        %420 = vset.pattern.permute.xlu0 0
        %421 = vperm.xlu0 %420, %v419
        %v422 = vpop.permute.xlu0 %421
        %vm423 = vcmp.eq.s32.totalorder %v422, 1
        %v424 = vlaneseq
        %v425 = vshrl.u32 %v424, 7
        %v426 = vsub.s32 0, %v425
        %v427 = vrot.slane %v418, %v426
        %v428 = vsel %vm423, %v427, %v416
        %vm429 = vcmp.eq.s32.totalorder %v367, 5
        %v430 = vld [vmem:[#allocation5 + $0x5] sm:$0x1]
        %v431 = vsel %vm429, 1, 0
        %432 = vset.pattern.permute.xlu0 0
        %433 = vperm.xlu0 %432, %v431
        %v434 = vpop.permute.xlu0 %433
        %vm435 = vcmp.eq.s32.totalorder %v434, 1
        %v436 = vlaneseq
        %v437 = vshrl.u32 %v436, 7
        %v438 = vsub.s32 0, %v437
        %v439 = vrot.slane %v430, %v438
        %v440 = vsel %vm435, %v439, %v428
        %v441 = vld [vmem:[%s3] sm:$0xff]
        %v442 = vld [vmem:[%s3 + $0x8] sm:$0xff]
        %v443 = vld [vmem:[%s3 + $0x10] sm:$0xff]
        %v444 = vld [vmem:[%s3 + $0x18] sm:$0xff]
        %v445 = vld [vmem:[#allocation7] sm:$0xff]
        %v446 = vld [vmem:[#allocation7 + $0x8] sm:$0xff]
        %v447 = vld [vmem:[#allocation7 + $0x10] sm:$0xff]
        %v448 = vld [vmem:[#allocation7 + $0x18] sm:$0xff]
        %vm449 = vcmask 261120
        %v451 = vsel %vm449, %v440, 0
        %453 = vmatprep.subr.mxu0 0.0
        %454 = vmatpush1.msra.mxu0 %v445
        %455 = vmatprep.subr.mxu0 0.0
        %456 = vmatpush1.msra.mxu0 %v446
        %457 = vmatprep.subr.mxu0 0.0
        %458 = vmatpush1.msra.mxu0 %v447
        %459 = vmatprep.subr.mxu0 0.0
        %460 = vmatpush1.msra.mxu0 %v448
        %461 = vmatprep.subr.mxu0 0.0
        %462 = vmatpush1.msra.mxu0 0.0
        %463 = vmatprep.subr.mxu0 0.0
        %464 = vmatpush1.msra.mxu0 0.0
        %465 = vmatprep.subr.mxu0 0.0
        %466 = vmatpush1.msra.mxu0 0.0
        %467 = vmatprep.subr.mxu0 0.0
        %468 = vmatpush1.msra.mxu0 0.0
        %469 = vmatprep.subr.mxu0 0.0
        %470 = vmatpush1.msra.mxu0 0.0
        %471 = vmatprep.subr.mxu0 0.0
        %472 = vmatpush1.msra.mxu0 0.0
        %473 = vmatprep.subr.mxu0 0.0
        %474 = vmatpush1.msra.mxu0 0.0
        %475 = vmatprep.subr.mxu0 0.0
        %476 = vmatpush1.msra.mxu0 0.0
        %477 = vmatprep.subr.mxu0 0.0
        %478 = vmatpush1.msra.mxu0 0.0
        %479 = vmatprep.subr.mxu0 0.0
        %480 = vmatpush1.msra.mxu0 0.0
        %481 = vmatprep.subr.mxu0 0.0
        %482 = vmatpush1.msra.mxu0 0.0
        %483 = vmatprep.subr.mxu0 0.0
        %484 = vmatpush1.msra.mxu0 0.0
        %485 = vmatprep.subr.mxu0 0.0
        %486 = vmatpush1.msra.mxu0 0.0
        %487 = vmatprep.subr.mxu0 0.0
        %488 = vmatpush1.msra.mxu0 0.0
        %489 = vmatprep.subr.mxu0 0.0
        %490 = vmatpush1.msra.mxu0 0.0
        %491 = vmatprep.subr.mxu0 0.0
        %492 = vmatpush1.msra.mxu0 0.0
        %493 = vmatprep.subr.mxu0 0.0
        %494 = vmatpush1.msra.mxu0 0.0
        %495 = vmatprep.subr.mxu0 0.0
        %496 = vmatpush1.msra.mxu0 0.0
        %497 = vmatprep.subr.mxu0 0.0
        %498 = vmatpush1.msra.mxu0 0.0
        %499 = vmatprep.subr.mxu0 0.0
        %500 = vmatpush1.msra.mxu0 0.0
        %501 = vmatprep.subr.mxu0 0.0
        %502 = vmatpush1.msra.mxu0 0.0
        %503 = vmatprep.subr.mxu0 0.0
        %504 = vmatpush1.msra.mxu0 0.0
        %505 = vmatprep.subr.mxu0 0.0
        %506 = vmatpush1.msra.mxu0 0.0
        %507 = vmatprep.subr.mxu0 0.0
        %508 = vmatpush1.msra.mxu0 0.0
        %509 = vmatprep.subr.mxu0 0.0
        %510 = vmatpush1.msra.mxu0 0.0
        %511 = vmatprep.subr.mxu0 0.0
        %512 = vmatpush1.msra.mxu0 0.0
        %513 = vmatprep.subr.mxu0 0.0
        %514 = vmatpush1.msra.mxu0 0.0
        %515 = vmatprep.subr.mxu0 0.0
        %516 = vmatpush1.msra.mxu0 0.0
        %517 = vmatprep.mubr.f32.mxu0 0.0
        %518 = vmatmul.mubr.f32.gmra.mrb[0].mxu0 %v451
        %v519 = vpop.f32.mrb[0].mxu0
        %v520 = vadd.f32 0.0, %v519
        %v521 = vpop.f32.mrb[0].mxu0
        %522 = vdwg.mxu0
        %v524 = vsel %vm449, %v368, 0
        %526 = vmatprep.subr.mxu0 0.0
        %527 = vmatpush1.msra.mxu0 %v441
        %528 = vmatprep.subr.mxu0 0.0
        %529 = vmatpush1.msra.mxu0 %v442
        %530 = vmatprep.subr.mxu0 0.0
        %531 = vmatpush1.msra.mxu0 %v443
        %532 = vmatprep.subr.mxu0 0.0
        %533 = vmatpush1.msra.mxu0 %v444
        %534 = vmatprep.subr.mxu0 0.0
        %535 = vmatpush1.msra.mxu0 0.0
        %536 = vmatprep.subr.mxu0 0.0
        %537 = vmatpush1.msra.mxu0 0.0
        %538 = vmatprep.subr.mxu0 0.0
        %539 = vmatpush1.msra.mxu0 0.0
        %540 = vmatprep.subr.mxu0 0.0
        %541 = vmatpush1.msra.mxu0 0.0
        %542 = vmatprep.subr.mxu0 0.0
        %543 = vmatpush1.msra.mxu0 0.0
        %544 = vmatprep.subr.mxu0 0.0
        %545 = vmatpush1.msra.mxu0 0.0
        %546 = vmatprep.subr.mxu0 0.0
        %547 = vmatpush1.msra.mxu0 0.0
        %548 = vmatprep.subr.mxu0 0.0
        %549 = vmatpush1.msra.mxu0 0.0
        %550 = vmatprep.subr.mxu0 0.0
        %551 = vmatpush1.msra.mxu0 0.0
        %552 = vmatprep.subr.mxu0 0.0
        %553 = vmatpush1.msra.mxu0 0.0
        %554 = vmatprep.subr.mxu0 0.0
        %555 = vmatpush1.msra.mxu0 0.0
        %556 = vmatprep.subr.mxu0 0.0
        %557 = vmatpush1.msra.mxu0 0.0
        %558 = vmatprep.subr.mxu0 0.0
        %559 = vmatpush1.msra.mxu0 0.0
        %560 = vmatprep.subr.mxu0 0.0
        %561 = vmatpush1.msra.mxu0 0.0
        %562 = vmatprep.subr.mxu0 0.0
        %563 = vmatpush1.msra.mxu0 0.0
        %564 = vmatprep.subr.mxu0 0.0
        %565 = vmatpush1.msra.mxu0 0.0
        %566 = vmatprep.subr.mxu0 0.0
        %567 = vmatpush1.msra.mxu0 0.0
        %568 = vmatprep.subr.mxu0 0.0
        %569 = vmatpush1.msra.mxu0 0.0
        %570 = vmatprep.subr.mxu0 0.0
        %571 = vmatpush1.msra.mxu0 0.0
        %572 = vmatprep.subr.mxu0 0.0
        %573 = vmatpush1.msra.mxu0 0.0
        %574 = vmatprep.subr.mxu0 0.0
        %575 = vmatpush1.msra.mxu0 0.0
        %576 = vmatprep.subr.mxu0 0.0
        %577 = vmatpush1.msra.mxu0 0.0
        %578 = vmatprep.subr.mxu0 0.0
        %579 = vmatpush1.msra.mxu0 0.0
        %580 = vmatprep.subr.mxu0 0.0
        %581 = vmatpush1.msra.mxu0 0.0
        %582 = vmatprep.subr.mxu0 0.0
        %583 = vmatpush1.msra.mxu0 0.0
        %584 = vmatprep.subr.mxu0 0.0
        %585 = vmatpush1.msra.mxu0 0.0
        %586 = vmatprep.subr.mxu0 0.0
        %587 = vmatpush1.msra.mxu0 0.0
        %588 = vmatprep.subr.mxu0 0.0
        %589 = vmatpush1.msra.mxu0 0.0
        %590 = vmatprep.mubr.f32.mxu0 0.0
        %591 = vmatmul.mubr.f32.gmra.mrb[0].mxu0 %v524
        %v592 = vpop.f32.mrb[0].mxu0
        %v593 = vadd.f32 %v520, %v592
        %v594 = vpop.f32.mrb[0].mxu0
        %595 = vdwg.mxu0
        %v596 = vld [vmem:[%s5] sm:$0x1]
        %v598 = vlaneseq
        %v599 = vshrl.u32 %v598, 7
        %v600 = vsub.s32 0, %v599
        %v601 = vrot.slane %v596, %v600
        %v603 = vadd.f32 %v593, %v601
        %v604 = vmax.f32 %v603, 0.0
        %v605 = vld [vmem:[%s6] sm:$0x1]
        %v607 = vlaneseq
        %v608 = vshrl.u32 %v607, 7
        %v609 = vsub.s32 0, %v608
        %v610 = vrot.slane %v605, %v609
        %v612 = vmul.f32 %v604, %v610
        %vm613 = vcmask 523264
        %v614 = vsel %vm613, %v612, 0.0
        %615 = vadd.xlane.f32.xlu0 %v614
        %v616 = vpop.xlane.xlu0 %615
        %v617 = vld [vmem:[#allocation2] sm:$0x1]
        %v619 = vlaneseq
        %v620 = vshrl.u32 %v619, 7
        %v621 = vsub.s32 0, %v620
        %v622 = vrot.slane %v617, %v621
        %v624 = vadd.f32 %v616, %v622
        %vm625 = vcmask 7168
        %626 = vst.msk [vmem:[%s366] sm:$0xff] %vm625, %v624
        %p627 = scmp.lt.s32.totalorder %s25, 1
        %s628 = scalar_select %p627, %s25, 1
        %s629 = smul.addr %s628, 8
        %s630 = scalar_lea.vmem %s8, %s629
        // Predicated region
        $region65: #{tpu_custom_call.1} parent=51 // pred_check
          %p631 = pneg %p221
        $region66: #{tpu_custom_call.1} parent=51 // pred_check_branch
          %633 = sbr.rel (%p631) target = $region68
        $region67: #{tpu_custom_call.1} parent=51 // pred_region
          _
        $region68: #{tpu_custom_call.1} parent=51 // pred_fallthru
          _
      $region52: #{tpu_custom_call.1} parent=5 // pred_fallthru
        _
      %p634 = scmp.le.s32.totalorder 2, %s20
      // Predicated region
      $region69: #{tpu_custom_call.1} parent=5 // pred_check
        %p635 = pneg %p634
      $region70: #{tpu_custom_call.1} parent=5 // pred_check_branch
        %637 = sbr.rel (%p635) target = $region72
      $region71: #{tpu_custom_call.1} parent=5 // pred_region
        %s638 = ssub.s32 %s20, 2
        // Predicated region
        $region73: #{tpu_custom_call.1} parent=71 // pred_check
          %p639 = pneg %p227
        $region74: #{tpu_custom_call.1} parent=71 // pred_check_branch
          %641 = sbr.rel (%p639) target = $region76
        $region75: #{tpu_custom_call.1} parent=71 // pred_region
          %p642 = scmp.lt.s32.totalorder %s26, 1
          %s643 = scalar_select %p642, %s26, 1
          %s644 = smul.addr %s643, 8
          %s645 = scalar_lea.vmem %s8, %s644
        $region76: #{tpu_custom_call.1} parent=71 // pred_fallthru
          _
      $region72: #{tpu_custom_call.1} parent=5 // pred_fallthru
        _
    $region6: #{tpu_custom_call.1} parent=1 // loop_footer
      %s24 = sadd.s32 1, %s20
    $region7: #{tpu_custom_call.1} parent=1 // loop_footer_branch
      %19 = sbr.rel target = $region3
    $region8: #{tpu_custom_call.1} parent=1 // loop_exit
      _
    %646 = vsyncpa [#allocation4], 1
    %s647 = scalar_lea.sflag [#allocation4], 1
    %648 = vsyncpa %s647, 1
    %649 = vsyncpa [#allocation6], 1

</llo_original>
